<compile_context>
chip_gen: v6e
topology: v6e:2x2x1
jax: 0.10.0
libtpu: 0.0.40
codegen_flags: <defaults>
</compile_context>

<pallas_src>
import functools
import math

import jax
import jax.numpy as jnp
from jax.experimental import pallas as pl
from jax.experimental.pallas import tpu as pltpu

_MASK_VALUE = -1e30                      # large finite negative (robust vs -inf)
_VMEM_LIMIT = 48 * 1024 * 1024           # fits v7x (64 MiB physical) with headroom


def _pick_tile(n, target):
    """Largest tile <= target that divides n (multiple of 8 when possible)."""
    if n <= target:
        return n
    for t in range(target, 7, -1):
        if n % t == 0 and t % 8 == 0:
            return t
    return n


# ---------------------------------------------------------------------------
# Linear:  y = x @ w_t + b      (w_t already transposed: (K, N))
# ---------------------------------------------------------------------------
def _linear_kernel(x_ref, w_ref, b_ref, o_ref):
    y = jnp.dot(x_ref[...], w_ref[...], preferred_element_type=jnp.float32)
    o_ref[...] = (y + b_ref[...].astype(jnp.float32)).astype(o_ref.dtype)


def _linear(x2d, w_t, b):
    M, K = x2d.shape
    K2, N = w_t.shape
    assert K == K2
    tm = _pick_tile(M, 256)
    b2 = b.reshape(1, N)
    return pl.pallas_call(
        _linear_kernel,
        out_shape=jax.ShapeDtypeStruct((M, N), x2d.dtype),
        grid=(M // tm,),
        in_specs=[
            pl.BlockSpec((tm, K), lambda i: (i, 0)),     # row tile of x
            pl.BlockSpec((K, N), lambda i: (0, 0)),      # resident weight
            pl.BlockSpec((1, N), lambda i: (0, 0)),      # bias
        ],
        out_specs=pl.BlockSpec((tm, N), lambda i: (i, 0)),
        compiler_params=pltpu.CompilerParams(
            dimension_semantics=("parallel",),
            vmem_limit_bytes=_VMEM_LIMIT),
    )(x2d, w_t, b2)


# ---------------------------------------------------------------------------
# Flash attention over (B*H, T, D), causal.
#   - compute skipped for fully-masked KV blocks (pl.when on block indices)
#   - KV DMAs for those blocks elided by clamping the kv block index
# ---------------------------------------------------------------------------
def _flash_kernel(q_ref, k_ref, v_ref, o_ref, m_sc, l_sc, acc_sc, *, tq, tk, scale):
    qi = pl.program_id(1)
    ki = pl.program_id(2)

    @pl.when(ki == 0)
    def _init():
        m_sc[...] = jnp.full_like(m_sc, -jnp.inf)
        l_sc[...] = jnp.zeros_like(l_sc)
        acc_sc[...] = jnp.zeros_like(acc_sc)

    # Only compute KV blocks that intersect the causal (lower-triangular) region.
    @pl.when(ki * tk < (qi + 1) * tq)
    def _compute():
        q = q_ref[0] * scale                                     # (tq, D), fold 1/sqrt(D)
        s = jax.lax.dot_general(q, k_ref[0], (((1,), (1,)), ((), ())),
                                preferred_element_type=jnp.float32)   # (tq, tk)
        row = qi * tq + jax.lax.broadcasted_iota(jnp.int32, (tq, tk), 0)
        col = ki * tk + jax.lax.broadcasted_iota(jnp.int32, (tq, tk), 1)
        s = jnp.where(row >= col, s, _MASK_VALUE)

        m_prev = m_sc[...]
        m_new = jnp.maximum(m_prev, jnp.max(s, axis=-1, keepdims=True))
        alpha = jnp.exp(m_prev - m_new)
        p = jnp.exp(s - m_new)
        l_sc[...] = alpha * l_sc[...] + jnp.sum(p, axis=-1, keepdims=True)
        acc_sc[...] = alpha * acc_sc[...] + jnp.dot(
            p.astype(v_ref.dtype), v_ref[0], preferred_element_type=jnp.float32)
        m_sc[...] = m_new

    @pl.when(ki == pl.num_programs(2) - 1)
    def _finalize():
        inv_l = pl.reciprocal(l_sc[...], approx=True)            # EUP, off the VALU
        o_ref[0] = (acc_sc[...] * inv_l).astype(o_ref.dtype)


def _flash_attention(q, k, v):
    BH, T, D = q.shape
    tq = _pick_tile(T, 128)
    tk = _pick_tile(T, 256)
    scale = 1.0 / math.sqrt(D)
    kernel = functools.partial(_flash_kernel, tq=tq, tk=tk, scale=scale)

    # Clamp the kv block index to the last block that the current query block
    # actually needs.  For fully-masked iterations the block index repeats, so
    # the pipeline skips the (useless) K/V DMA entirely.
    def kv_index_map(b, i, j):
        last_needed = ((i + 1) * tq - 1) // tk
        return (b, jnp.minimum(j, last_needed), 0)

    return pl.pallas_call(
        kernel,
        out_shape=jax.ShapeDtypeStruct((BH, T, D), q.dtype),
        grid=(BH, T // tq, T // tk),
        in_specs=[
            pl.BlockSpec((1, tq, D), lambda b, i, j: (b, i, 0)),
            pl.BlockSpec((1, tk, D), kv_index_map),
            pl.BlockSpec((1, tk, D), kv_index_map),
        ],
        out_specs=pl.BlockSpec((1, tq, D), lambda b, i, j: (b, i, 0)),
        scratch_shapes=[
            pltpu.VMEM((tq, 1), jnp.float32),   # running max
            pltpu.VMEM((tq, 1), jnp.float32),   # running denom
            pltpu.VMEM((tq, D), jnp.float32),   # output accumulator
        ],
        compiler_params=pltpu.CompilerParams(
            dimension_semantics=("parallel", "parallel", "arbitrary"),
            vmem_limit_bytes=_VMEM_LIMIT),
    )(q, k, v)


# ---------------------------------------------------------------------------
# Full module forward.
# ---------------------------------------------------------------------------
def causal_self_attention(x, w_attn, b_attn, w_proj, b_proj, *, n_heads):
    B, T, C = x.shape
    assert C % n_heads == 0
    H = n_heads
    D = C // H

    # Pre-transpose weights once in the wrapper (no in-kernel .T / XLU relayout).
    w_attn_t = jnp.transpose(w_attn)        # (C, 3C)
    w_proj_t = jnp.transpose(w_proj)        # (C, C)

    # 1. QKV projection.
    qkv = _linear(x.reshape(B * T, C), w_attn_t, b_attn)          # (B*T, 3C)

    # Split q/k/v and heads (XLA-level layout plumbing).
    qkv = qkv.reshape(B, T, 3, H, D).transpose(2, 0, 3, 1, 4)     # (3, B, H, T, D)
    q = qkv[0].reshape(B * H, T, D)
    k = qkv[1].reshape(B * H, T, D)
    v = qkv[2].reshape(B * H, T, D)

    # 2. Causal flash attention.
    attn = _flash_attention(q, k, v)                              # (B*H, T, D)
    attn = attn.reshape(B, H, T, D).transpose(0, 2, 1, 3).reshape(B * T, C)

    # 3. Output projection.
    y = _linear(attn, w_proj_t, b_proj)                           # (B*T, C)
    return y.reshape(B, T, C)
    # TODO(synk): for lane-dense stores when head_dim < 128, pack all heads into one
    # grid step (block over H) so the attention output tile is C lanes wide.


# ---------------------------------------------------------------------------
# Pure-JAX reference (matches the PyTorch module).
# ---------------------------------------------------------------------------
def _reference(x, w_attn, b_attn, w_proj, b_proj, *, n_heads):
    B, T, C = x.shape
    D = C // n_heads
    qkv = jnp.einsum('btc,oc->bto', x, w_attn) + b_attn
    q, k, v = jnp.split(qkv, 3, axis=-1)
    q = q.reshape(B, T, n_heads, D).transpose(0, 2, 1, 3)
    k = k.reshape(B, T, n_heads, D).transpose(0, 2, 1, 3)
    v = v.reshape(B, T, n_heads, D).transpose(0, 2, 1, 3)
    s = jnp.einsum('bhtd,bhsd->bhts', q, k) / math.sqrt(D)
    mask = jnp.tril(jnp.ones((T, T), dtype=bool))
    s = jnp.where(mask, s, -jnp.inf)
    p = jax.nn.softmax(s, axis=-1)
    o = jnp.einsum('bhts,bhsd->bhtd', p, v)
    o = o.transpose(0, 2, 1, 3).reshape(B, T, C)
    return jnp.einsum('btc,oc->bto', o, w_proj) + b_proj


if __name__ == "__main__":
    # config: n_embed=32, n_heads=4 -> head_dim=8 ; B=2, T=8
    B, T, C, n_heads = 2, 8, 32, 4

    key = jax.random.PRNGKey(0)
    kx, kw1, kb1, kw2, kb2 = jax.random.split(key, 5)

    x = jax.random.normal(kx, (B, T, C), dtype=jnp.float32)
    # nn.Linear(C, 3C): weight (3C, C), bias (3C,)
    w_attn = jax.random.normal(kw1, (3 * C, C), dtype=jnp.float32) * 0.02
    b_attn = jax.random.normal(kb1, (3 * C,), dtype=jnp.float32) * 0.02
    # nn.Linear(C, C): weight (C, C), bias (C,)
    w_proj = jax.random.normal(kw2, (C, C), dtype=jnp.float32) * 0.02
    b_proj = jax.random.normal(kb2, (C,), dtype=jnp.float32) * 0.02

    out = causal_self_attention(x, w_attn, b_attn, w_proj, b_proj, n_heads=n_heads)
    out = jax.block_until_ready(out)

    ref = _reference(x, w_attn, b_attn, w_proj, b_proj, n_heads=n_heads)
    assert out.shape == (B, T, C)
    assert jnp.allclose(out, ref, atol=1e-3, rtol=1e-3), "mismatch vs JAX reference"

    print("KERNEL_OK")
</pallas_src>

<mosaic_0001>
module attributes {stable_mosaic.version = 11 : i64} {
  func.func @_linear_kernel(%arg0: i32, %arg1: memref<16x32xf32, #tpu.memory_space<vmem>>, %arg2: memref<32x96xf32, #tpu.memory_space<vmem>>, %arg3: memref<1x96xf32, #tpu.memory_space<vmem>>, %arg4: memref<16x96xf32, #tpu.memory_space<vmem>>) attributes {dimension_semantics = [#tpu.dimension_semantics<parallel>], iteration_bounds = array<i64: 1>, scalar_prefetch = 0 : i64, scratch_operands = 0 : i64, tpu.core_type = #tpu.core_type<tc>, window_params = [{transform_indices = @transform_0, window_bounds = array<i64: 16, 32>}, {pipeline_mode = #tpu.pipeline_mode<synchronous>, transform_indices = @transform_1, window_bounds = array<i64: 32, 96>}, {pipeline_mode = #tpu.pipeline_mode<synchronous>, transform_indices = @transform_2, window_bounds = array<i64: 1, 96>}, {transform_indices = @transform_3, window_bounds = array<i64: 16, 96>}]} {
    %c0 = arith.constant 0 : index
    %c0_0 = arith.constant 0 : index
    %0 = vector.load %arg1[%c0, %c0_0] : memref<16x32xf32, #tpu.memory_space<vmem>>, vector<16x32xf32>
    %c0_1 = arith.constant 0 : index
    %c0_2 = arith.constant 0 : index
    %1 = vector.load %arg2[%c0_1, %c0_2] : memref<32x96xf32, #tpu.memory_space<vmem>>, vector<32x96xf32>
    %cst = arith.constant dense<0.000000e+00> : vector<16x96xf32>
    %2 = tpu.matmul %0, %1, %cst {dimension_numbers = #tpu.dot_dimension_numbers<[1], [0], [0], [1], [0, 0, 1, 1], [], []>} : vector<16x32xf32>, vector<32x96xf32>, vector<16x96xf32> -> vector<16x96xf32>
    %c0_3 = arith.constant 0 : index
    %c0_4 = arith.constant 0 : index
    %3 = vector.load %arg3[%c0_3, %c0_4] : memref<1x96xf32, #tpu.memory_space<vmem>>, vector<1x96xf32>
    %4 = vector.broadcast %3 : vector<1x96xf32> to vector<16x96xf32>
    %5 = arith.addf %2, %4 : vector<16x96xf32>
    %c0_5 = arith.constant 0 : index
    %c0_6 = arith.constant 0 : index
    %6 = vector.load %arg4[%c0_5, %c0_6] : memref<16x96xf32, #tpu.memory_space<vmem>>, vector<16x96xf32>
    tpu.vector_store %arg4[%c0_5, %c0_6], %5 {strides = array<i32>} : memref<16x96xf32, #tpu.memory_space<vmem>>, vector<16x96xf32>,
    return
  }
  func.func @transform_0(%arg0: i32) -> (i32, i32) {
    %c0_i32 = arith.constant 0 : i32
    %c0_i32_0 = arith.constant 0 : i32
    return %arg0, %c0_i32 : i32, i32
  }
  func.func @transform_1(%arg0: i32) -> (i32, i32) {
    %c0_i32 = arith.constant 0 : i32
    %c0_i32_0 = arith.constant 0 : i32
    %c0_i32_1 = arith.constant 0 : i32
    return %c0_i32, %c0_i32_0 : i32, i32
  }
  func.func @transform_2(%arg0: i32) -> (i32, i32) {
    %c0_i32 = arith.constant 0 : i32
    %c0_i32_0 = arith.constant 0 : i32
    %c0_i32_1 = arith.constant 0 : i32
    return %c0_i32, %c0_i32_0 : i32, i32
  }
  func.func @transform_3(%arg0: i32) -> (i32, i32) {
    %c0_i32 = arith.constant 0 : i32
    %c0_i32_0 = arith.constant 0 : i32
    return %arg0, %c0_i32 : i32, i32
  }
}

</mosaic_0001>

<llo_original>
// kernel: tpu_custom_call.1
$region0: #{tpu_custom_call.1}
  #allocation0 [shape = 'u32[]', space=smem, size = 0x4, offset = 0x4, fixed_abs, tag = 'smem constant byte address 0x4 - core index']
  #allocation1 [shape = 'u32[144,128]{1,0:T(1,128)}', space=vmem, size = 0x12000, scoped, tag = 'internal scratch']
  %s0 = inlined_call_operand.hbm [shape: f32[16,32], index: 0, kind: input, shape index: {}]
  %s1 = inlined_call_operand.hbm [shape: f32[32,96], index: 1, kind: input, shape index: {}]
  %s2 = inlined_call_operand.vmem [shape: f32[1,96], index: 2, kind: input, shape index: {}]
  %s3 = inlined_call_operand.hbm [shape: f32[16,96], index: 3, kind: output, shape index: {}]
  %s4 = sld [smem:[#allocation0]]
  $region30: #{tpu_custom_call.1} parent=0
    _
  %s6 = ssub.s32 1, %s4
  %s7 = scalar_select 0, %s6, %s4
  $region1: #{tpu_custom_call.1} parent=0
    #allocation2 [shape = 'u8[8192]{0}', space=vmem, size = 0x2000, scoped, tag = 'input window, operand 0, single buffered']
    #allocation3 [shape = 's32[1]{0}', space=sflag, size = 0x4, scoped, tag = 'scoped memory for tpu_custom_call.1']
    #allocation4 [shape = 's32[1]{0}', space=sflag, size = 0x4, scoped, tag = 'scoped memory for tpu_custom_call.1']
    #allocation5 [shape = 'u8[16384]{0}', space=vmem, size = 0x4000, scoped, tag = 'input window, operand 1, single buffered']
    #allocation6 [shape = 's32[1]{0}', space=sflag, size = 0x4, scoped, tag = 'scoped memory for tpu_custom_call.1']
    #allocation7 [shape = 'u8[8192]{0}', space=vmem, size = 0x2000, scoped, tag = 'output window, operand 0, single buffered']
    %8 = vsyncpa [#allocation3], 0
    %9 = vsyncpa [#allocation6], 0
    %10 = vsyncpa [#allocation4], 0
    // Predicated region
    $region2: #{tpu_custom_call.1} parent=1 // pred_check
      _
    $region3: #{tpu_custom_call.1} parent=1 // pred_check_branch
      %12 = sbr.rel (0) target = $region5
    $region4: #{tpu_custom_call.1} parent=1 // pred_region
      %s14 = ssub.s32 256, 256
      %15 = vsyncadd [#allocation3], %s14
      %s16 = sshll.u32 [#allocation2], 4
      %s17 = int_to_ptr.vmem [resolvable:$true] %s16
      %22 = dma.hbm_to_vmem [thread:$0]  %s0, 256, %s17, [#allocation3], 128, 128, 8
    $region5: #{tpu_custom_call.1} parent=1 // pred_fallthru
      _
    // Predicated region
    $region6: #{tpu_custom_call.1} parent=1 // pred_check
      _
    $region7: #{tpu_custom_call.1} parent=1 // pred_check_branch
      %24 = sbr.rel (0) target = $region9
    $region8: #{tpu_custom_call.1} parent=1 // pred_region
      %s26 = ssub.s32 512, 512
      %27 = vsyncadd [#allocation6], %s26
      %s28 = sshll.u32 [#allocation5], 4
      %s29 = int_to_ptr.vmem [resolvable:$true] %s28
      %34 = dma.hbm_to_vmem [thread:$0]  %s1, 512, %s29, [#allocation6], 128, 128, 8
    $region9: #{tpu_custom_call.1} parent=1 // pred_fallthru
      _
    // Predicated region
    $region10: #{tpu_custom_call.1} parent=1 // pred_check
      _
    $region11: #{tpu_custom_call.1} parent=1 // pred_check_branch
      %36 = sbr.rel (0) target = $region13
    $region12: #{tpu_custom_call.1} parent=1 // pred_region
      _
    $region13: #{tpu_custom_call.1} parent=1 // pred_fallthru
      _
    // Predicated region
    $region14: #{tpu_custom_call.1} parent=1 // pred_check
      _
    $region15: #{tpu_custom_call.1} parent=1 // pred_check_branch
      %38 = sbr.rel (0) target = $region17
    $region16: #{tpu_custom_call.1} parent=1 // pred_region
      %39 = dma.done [#allocation3], 256
    $region17: #{tpu_custom_call.1} parent=1 // pred_fallthru
      _
    // Predicated region
    $region18: #{tpu_custom_call.1} parent=1 // pred_check
      _
    $region19: #{tpu_custom_call.1} parent=1 // pred_check_branch
      %41 = sbr.rel (0) target = $region21
    $region20: #{tpu_custom_call.1} parent=1 // pred_region
      %42 = dma.done [#allocation6], 512
    $region21: #{tpu_custom_call.1} parent=1 // pred_fallthru
      _
    %v43 = vld [vmem:[#allocation2] sm:$0xff]
    %v44 = vld [vmem:[#allocation2 + $0x8] sm:$0xff]
    %v45 = vld [vmem:[#allocation5] sm:$0xff]
    %v46 = vld [vmem:[#allocation5 + $0x8] sm:$0xff]
    %v47 = vld [vmem:[#allocation5 + $0x10] sm:$0xff]
    %v48 = vld [vmem:[#allocation5 + $0x18] sm:$0xff]
    %v49 = vld [vmem:[%s2] sm:$0x1]
    %v51 = vlaneseq
    %v52 = vshrl.u32 %v51, 7
    %v53 = vsub.s32 0, %v52
    %v54 = vrot.slane %v49, %v53
    %vm56 = vcmask 261120
    %v58 = vsel %vm56, %v43, 0
    %v61 = vsel %vm56, %v44, 0
    %63 = vmatprep.subr.mxu0 0.0
    %64 = vmatpush1.msra.mxu0 0.0
    %65 = vmatprep.subr.mxu0 0.0
    %66 = vmatpush1.msra.mxu0 0.0
    %67 = vmatprep.subr.mxu0 0.0
    %68 = vmatpush1.msra.mxu0 0.0
    %69 = vmatprep.subr.mxu0 0.0
    %70 = vmatpush1.msra.mxu0 0.0
    %71 = vmatprep.subr.mxu0 0.0
    %72 = vmatpush1.msra.mxu0 0.0
    %73 = vmatprep.subr.mxu0 0.0
    %74 = vmatpush1.msra.mxu0 0.0
    %75 = vmatprep.subr.mxu0 0.0
    %76 = vmatpush1.msra.mxu0 0.0
    %77 = vmatprep.subr.mxu0 0.0
    %78 = vmatpush1.msra.mxu0 0.0
    %79 = vmatprep.subr.mxu0 0.0
    %80 = vmatpush1.msra.mxu0 0.0
    %81 = vmatprep.subr.mxu0 0.0
    %82 = vmatpush1.msra.mxu0 0.0
    %83 = vmatprep.subr.mxu0 0.0
    %84 = vmatpush1.msra.mxu0 0.0
    %85 = vmatprep.subr.mxu0 0.0
    %86 = vmatpush1.msra.mxu0 0.0
    %87 = vmatprep.subr.mxu0 0.0
    %88 = vmatpush1.msra.mxu0 %v48
    %89 = vmatprep.subr.mxu0 0.0
    %90 = vmatpush1.msra.mxu0 %v47
    %91 = vmatprep.subr.mxu0 0.0
    %92 = vmatpush1.msra.mxu0 %v46
    %93 = vmatprep.subr.mxu0 0.0
    %94 = vmatpush1.msra.mxu0 %v45
    %95 = vmatprep.subr.mxu0 0.0
    %96 = vmatpush2.msra.mxu0 0.0
    %97 = vmatprep.subr.mxu0 0.0
    %98 = vmatpush2.msra.mxu0 0.0
    %99 = vmatprep.subr.mxu0 0.0
    %100 = vmatpush2.msra.mxu0 0.0
    %101 = vmatprep.subr.mxu0 0.0
    %102 = vmatpush2.msra.mxu0 0.0
    %103 = vmatprep.subr.mxu0 0.0
    %104 = vmatpush2.msra.mxu0 0.0
    %105 = vmatprep.subr.mxu0 0.0
    %106 = vmatpush2.msra.mxu0 0.0
    %107 = vmatprep.subr.mxu0 0.0
    %108 = vmatpush2.msra.mxu0 0.0
    %109 = vmatprep.subr.mxu0 0.0
    %110 = vmatpush2.msra.mxu0 0.0
    %111 = vmatprep.subr.mxu0 0.0
    %112 = vmatpush2.msra.mxu0 0.0
    %113 = vmatprep.subr.mxu0 0.0
    %114 = vmatpush2.msra.mxu0 0.0
    %115 = vmatprep.subr.mxu0 0.0
    %116 = vmatpush2.msra.mxu0 0.0
    %117 = vmatprep.subr.mxu0 0.0
    %118 = vmatpush2.msra.mxu0 0.0
    %119 = vmatprep.subr.mxu0 0.0
    %120 = vmatpush2.msra.mxu0 0.0
    %121 = vmatprep.subr.mxu0 0.0
    %122 = vmatpush2.msra.mxu0 0.0
    %123 = vmatprep.subr.mxu0 0.0
    %124 = vmatpush2.msra.mxu0 0.0
    %125 = vmatprep.subr.mxu0 0.0
    %126 = vmatpush2.msra.mxu0 0.0
    %127 = vmatprep.mubr.f32.mxu0 0.0
    %128 = vmatmul.mubr.f32.gmra.mxu0 %v58
    %v129 = vpop.f32.mrf.mxu0
    %v130 = vadd.f32 %v54, %v129
    %v131 = vpop.f32.mrf.mxu0
    %132 = vmatprep.mubr.f32.mxu0 0.0
    %133 = vmatmul.mubr.f32.gmra.mxu0 %v61
    %v134 = vpop.f32.mrf.mxu0
    %v135 = vadd.f32 %v54, %v134
    %v136 = vpop.f32.mrf.mxu0
    %137 = vdwg.mxu0
    %vm138 = vcmask 785408
    %139 = vst.msk [vmem:[#allocation7] sm:$0xff] %vm138, %v130
    %140 = vst.msk [vmem:[#allocation7 + $0x8] sm:$0xff] %vm138, %v135
    // Predicated region
    $region22: #{tpu_custom_call.1} parent=1 // pred_check
      _
    $region23: #{tpu_custom_call.1} parent=1 // pred_check_branch
      %142 = sbr.rel (0) target = $region25
    $region24: #{tpu_custom_call.1} parent=1 // pred_region
      %s144 = ssub.s32 256, 256
      %145 = vsyncadd [#allocation4], %s144
      %s146 = sshll.u32 [#allocation7], 4
      %s147 = int_to_ptr.vmem [resolvable:$true] %s146
      %152 = dma.vmem_to_hbm [thread:$0]  %s147, 256, %s3, [#allocation4], 128, 128, 8
    $region25: #{tpu_custom_call.1} parent=1 // pred_fallthru
      _
    // Predicated region
    $region26: #{tpu_custom_call.1} parent=1 // pred_check
      _
    $region27: #{tpu_custom_call.1} parent=1 // pred_check_branch
      %154 = sbr.rel (0) target = $region29
    $region28: #{tpu_custom_call.1} parent=1 // pred_region
      %155 = dma.done [#allocation4], 256
    $region29: #{tpu_custom_call.1} parent=1 // pred_fallthru
      _
    %156 = vsyncpa [#allocation3], 1
    %157 = vsyncpa [#allocation6], 1
    %158 = vsyncpa [#allocation4], 1

</llo_original>
